<compile_context>
chip_gen: v7x
topology: tpu7x:2x2x1
jax: 0.10.0
libtpu: 0.0.40
codegen_flags: <defaults>
</compile_context>

<pallas_src>
import functools

import jax
import jax.numpy as jnp
from jax.experimental import pallas as pl
from jax.experimental.pallas import tpu as pltpu

_LANES = 128


# ---------------------------------------------------------------------------
# Kernels
# ---------------------------------------------------------------------------

def _rmsnorm_kernel(x_ref, w_ref, o_ref, *, eps):
    """Plain path: per-row RMSNorm over the last axis of the (br, dim) block."""
    x = x_ref[...].astype(jnp.float32)
    ms = jnp.mean(x * x, axis=-1, keepdims=True)
    inv = jax.lax.rsqrt(ms + eps)
    o_ref[...] = (x * inv * w_ref[...]).astype(o_ref.dtype)


def _rmsnorm_gated_kernel(x_ref, z_ref, w_ref, o_ref, *, eps):
    z = z_ref[...].astype(jnp.float32)
    x = x_ref[...].astype(jnp.float32) * (z * jax.nn.sigmoid(z))   # x * silu(z)
    ms = jnp.mean(x * x, axis=-1, keepdims=True)
    inv = jax.lax.rsqrt(ms + eps)
    o_ref[...] = (x * inv * w_ref[...]).astype(o_ref.dtype)


def _segment_inv_rms(x, seg_ref, inv_dim, eps):
    """Per-segment inverse RMS for lane-packed rows.

    x: (br, 128) f32 where each row holds k = 128/dim original rows.
    seg_ref: resident (128, 128) 0/1 matrix with seg[i, j] = (i//dim == j//dim).
    The matmul runs on the otherwise idle MXU; HIGHEST precision keeps the
    sum-of-squares f32 accurate.  Mixing only happens within a row, so garbage
    rows from a partial trailing block stay contained.
    """
    xx = x * x
    ssum = jax.lax.dot_general(
        xx, seg_ref[...], (((1,), (0,)), ((), ())),
        precision=jax.lax.Precision.HIGHEST,
        preferred_element_type=jnp.float32)
    return jax.lax.rsqrt(ssum * inv_dim + eps)


def _rmsnorm_packed_kernel(x_ref, w_ref, seg_ref, o_ref, *, eps, inv_dim):
    x = x_ref[...].astype(jnp.float32)
    inv = _segment_inv_rms(x, seg_ref, inv_dim, eps)
    o_ref[...] = (x * inv * w_ref[...]).astype(o_ref.dtype)


def _rmsnorm_packed_gated_kernel(x_ref, z_ref, w_ref, seg_ref, o_ref, *, eps, inv_dim):
    z = z_ref[...].astype(jnp.float32)
    x = x_ref[...].astype(jnp.float32) * (z * jax.nn.sigmoid(z))
    inv = _segment_inv_rms(x, seg_ref, inv_dim, eps)
    o_ref[...] = (x * inv * w_ref[...]).astype(o_ref.dtype)


# ---------------------------------------------------------------------------
# Tiling policy
# ---------------------------------------------------------------------------

def _sublane_multiple(dtype) -> int:
    # f32 -> 8, bf16 -> 16, int8/fp8 -> 32 (sub-32-bit dtypes pack along sublanes).
    return max(8, 32 // jnp.dtype(dtype).itemsize)


def _vmem_budget_bytes() -> tuple[int, int]:
    """(buffered-bytes budget used for tiling, explicit vmem_limit_bytes)."""
    try:
        kind = jax.devices()[0].device_kind.lower()
    except Exception:  # pragma: no cover - defensive; default to larger VMEM
        kind = ""
    if "v7" in kind:
        # v7x: 64 MiB physical VMEM per TC.  32 MiB of buffered I/O (incl. the
        # f32 intermediates counted below) under a 48 MiB scoped limit leaves
        # headroom for Mosaic's own scratch.
        return 32 << 20, 48 << 20
    # v5e / v6e: 128 MiB physical VMEM.  Explicit limit matters on v5e whose
    # default scoped VMEM is only 16 MiB.
    return 64 << 20, 80 << 20


def _pick_block_rows(rows, dim, dtype, num_pipelined, budget_bytes, requested,
                     min_steps=4):
    sub = _sublane_multiple(dtype)
    itemsize = jnp.dtype(dtype).itemsize
    if requested is not None:
        cand = max(int(requested), 1)
    else:
        # VMEM bytes per row: each pipelined array (x [, z], out) is double
        # buffered; plus ~2 f32 intermediates (upcast x / gated silu product)
        # materialized inside the kernel.
        per_row = dim * itemsize * num_pipelined * 2 + 2 * dim * 4
        cand = budget_bytes // max(per_row, 1)
        # HBM-bound: the lever is tile *bytes*.  ~6 MiB per pipelined input
        # buffer amortizes the ~0.35us/step overhead even for narrow dims.
        target_tile_bytes = 6 << 20
        cand = min(cand, max(target_tile_bytes // max(dim * itemsize, 1), sub))
        # Never collapse a non-trivial problem to a single grid step: keep at
        # least `min_steps` blocks so DMA/compute overlap and the v7x dual-TC
        # split of the "parallel" row axis stay alive.
        cand = min(cand, max(pl.cdiv(rows, min_steps), sub))
    cand = max(sub, (cand // sub) * sub)
    if cand >= rows:
        return rows   # genuinely tiny problem: one block covering all rows (legal)
    return cand


# ---------------------------------------------------------------------------
# Wrapper
# ---------------------------------------------------------------------------

def rms_norm(x, weight, z=None, eps=1e-6, block_rows=None):
    """RMSNorm over the last axis of x. Optional gating: x = x * silu(z) first.

    x: (..., dim), weight: (dim,), z: same shape as x or None.
    """
    orig_shape = x.shape
    dim = orig_shape[-1]
    assert weight.shape == (dim,)
    if z is not None:
        assert z.shape == x.shape

    out_dtype = x.dtype
    x2 = x.reshape(-1, dim)
    z2 = None if z is None else z.reshape(-1, dim)
    rows = x2.shape[0]
    w_f32 = weight.astype(jnp.float32)          # upcast once, stays resident

    # Lane packing for narrow feature dims: fold k rows into the 128-lane axis
    # so every vreg / HBM burst / output store is lane-dense.  dim % 128 == 0 is
    # already the fast path and needs no packing.
    pack = (dim < _LANES) and (_LANES % dim == 0)
    # TODO(synk): dims >= 128 that are not multiples of 128 still take the
    # masked-lane path (correct, just not lane-dense).

    if pack:
        k = _LANES // dim
        pdim = _LANES
        sub = _sublane_multiple(x.dtype)
        rows_p = pl.cdiv(rows, k * sub) * (k * sub)   # packed rows sublane-aligned
        pad = rows_p - rows
        if pad:
            x2 = jnp.pad(x2, ((0, pad), (0, 0)))      # zero rows are benign
            if z2 is not None:
                z2 = jnp.pad(z2, ((0, pad), (0, 0)))
        prows = rows_p // k
        x2 = x2.reshape(prows, pdim)
        if z2 is not None:
            z2 = z2.reshape(prows, pdim)
        w2 = jnp.tile(w_f32, k).reshape(1, pdim)
        seg_id = jnp.arange(pdim, dtype=jnp.int32) // dim
        seg_mat = (seg_id[:, None] == seg_id[None, :]).astype(jnp.float32)
    else:
        k = 1
        pdim = dim
        prows = rows
        w2 = w_f32.reshape(1, dim)
        seg_mat = None

    num_pipelined = 2 if z is None else 3            # x (+z) + out
    budget, vmem_limit = _vmem_budget_bytes()
    br = _pick_block_rows(prows, pdim, x.dtype, num_pipelined, budget, block_rows)

    grid = (pl.cdiv(prows, br),)
    row_spec = pl.BlockSpec((br, pdim), lambda i: (i, 0))
    const_spec = lambda shape: pl.BlockSpec(shape, lambda i: (0, 0))
    out_shape = jax.ShapeDtypeStruct((prows, pdim), out_dtype)
    cparams = pltpu.CompilerParams(
        dimension_semantics=("parallel",),
        vmem_limit_bytes=vmem_limit,
    )

    if pack:
        if z is None:
            kern = functools.partial(_rmsnorm_packed_kernel, eps=eps, inv_dim=1.0 / dim)
            in_specs = [row_spec, const_spec((1, pdim)), const_spec((pdim, pdim))]
            args = (x2, w2, seg_mat)
        else:
            kern = functools.partial(_rmsnorm_packed_gated_kernel, eps=eps, inv_dim=1.0 / dim)
            in_specs = [row_spec, row_spec, const_spec((1, pdim)), const_spec((pdim, pdim))]
            args = (x2, z2, w2, seg_mat)
    else:
        if z is None:
            kern = functools.partial(_rmsnorm_kernel, eps=eps)
            in_specs = [row_spec, const_spec((1, pdim))]
            args = (x2, w2)
        else:
            kern = functools.partial(_rmsnorm_gated_kernel, eps=eps)
            in_specs = [row_spec, row_spec, const_spec((1, pdim))]
            args = (x2, z2, w2)

    out = pl.pallas_call(
        kern,
        out_shape=out_shape,
        grid=grid,
        in_specs=in_specs,
        out_specs=row_spec,
        compiler_params=cparams,
    )(*args)

    if pack:
        out = out.reshape(prows * k, dim)
        if prows * k != rows:
            out = out[:rows]
    return out.reshape(orig_shape)


# ---------------------------------------------------------------------------
# Reference & self-test
# ---------------------------------------------------------------------------

def _reference_rms_norm(x, weight, z=None, eps=1e-6):
    xf = x.astype(jnp.float32)
    if z is not None:
        zf = z.astype(jnp.float32)
        xf = xf * (zf * jax.nn.sigmoid(zf))
    ms = jnp.mean(xf * xf, axis=-1, keepdims=True)
    return (xf * jax.lax.rsqrt(ms + eps) * weight.astype(jnp.float32)).astype(x.dtype)


if __name__ == "__main__":
    key = jax.random.PRNGKey(0)
    kx, kz, kx2, kx3 = jax.random.split(key, 4)

    batch, seq, dim = 2, 8, 32
    x = jax.random.normal(kx, (batch, seq, dim), dtype=jnp.float32)
    z = jax.random.normal(kz, (batch, seq, dim), dtype=jnp.float32)
    weight = jnp.ones((dim,), dtype=jnp.float32)   # nn.Parameter(torch.ones(dim))

    # Un-gated, lane-packed path (dim=32 -> 4 rows folded into 128 lanes).
    out = jax.block_until_ready(rms_norm(x, weight, eps=1e-6))
    ref = _reference_rms_norm(x, weight, eps=1e-6)
    assert out.shape == x.shape and out.dtype == x.dtype
    assert jnp.allclose(out, ref, atol=2e-5, rtol=2e-5)

    # Gated path: x * silu(z) then RMSNorm (lane-packed).
    out_g = jax.block_until_ready(rms_norm(x, weight, z=z, eps=1e-6))
    ref_g = _reference_rms_norm(x, weight, z=z, eps=1e-6)
    assert jnp.allclose(out_g, ref_g, atol=2e-5, rtol=2e-5)

    # dim % 128 == 0 fast path with a partial trailing row block (rows=15, br=8).
    dim2 = 256
    w2_ = jnp.ones((dim2,), dtype=jnp.float32)
    xr = jax.random.normal(kx2, (3, 5, dim2), dtype=jnp.float32)
    out_r = jax.block_until_ready(rms_norm(xr, w2_, eps=1e-6))
    ref_r = _reference_rms_norm(xr, w2_, eps=1e-6)
    assert jnp.allclose(out_r, ref_r, atol=2e-5, rtol=2e-5)

    # dim not packable and not lane-dense (48): masked-lane path stays correct.
    dim3 = 48
    w3_ = jnp.ones((dim3,), dtype=jnp.float32)
    xs = jax.random.normal(kx3, (3, 5, dim3), dtype=jnp.float32)
    out_s = jax.block_until_ready(rms_norm(xs, w3_, eps=1e-6, block_rows=8))
    ref_s = _reference_rms_norm(xs, w3_, eps=1e-6)
    assert jnp.allclose(out_s, ref_s, atol=2e-5, rtol=2e-5)

    # bf16 I/O with gating (f32 accumulation inside the kernel).
    xb = x.astype(jnp.bfloat16)
    zb = z.astype(jnp.bfloat16)
    out_b = jax.block_until_ready(rms_norm(xb, weight, z=zb, eps=1e-6))
    ref_b = _reference_rms_norm(xb, weight, z=zb, eps=1e-6)
    assert out_b.dtype == jnp.bfloat16
    assert jnp.allclose(out_b.astype(jnp.float32), ref_b.astype(jnp.float32),
                        atol=2e-2, rtol=2e-2)

    print("KERNEL_OK")
</pallas_src>

<mosaic_0001>
module attributes {stable_mosaic.version = 11 : i64} {
  func.func @_rmsnorm_packed_kernel(%arg0: i32, %arg1: memref<8x128xf32, #tpu.memory_space<vmem>>, %arg2: memref<1x128xf32, #tpu.memory_space<vmem>>, %arg3: memref<128x128xf32, #tpu.memory_space<vmem>>, %arg4: memref<8x128xf32, #tpu.memory_space<vmem>>) attributes {dimension_semantics = [#tpu.dimension_semantics<parallel>], iteration_bounds = array<i64: 1>, scalar_prefetch = 0 : i64, scratch_operands = 0 : i64, tpu.core_type = #tpu.core_type<tc>, window_params = [{transform_indices = @transform_0, window_bounds = array<i64: 8, 128>}, {pipeline_mode = #tpu.pipeline_mode<synchronous>, transform_indices = @transform_1, window_bounds = array<i64: 1, 128>}, {pipeline_mode = #tpu.pipeline_mode<synchronous>, transform_indices = @transform_2, window_bounds = array<i64: 128, 128>}, {transform_indices = @transform_3, window_bounds = array<i64: 8, 128>}]} {
    %c0 = arith.constant 0 : index
    %c0_0 = arith.constant 0 : index
    %0 = vector.load %arg1[%c0, %c0_0] : memref<8x128xf32, #tpu.memory_space<vmem>>, vector<8x128xf32>
    %1 = arith.mulf %0, %0 : vector<8x128xf32>
    %c0_1 = arith.constant 0 : index
    %c0_2 = arith.constant 0 : index
    %2 = vector.load %arg3[%c0_1, %c0_2] : memref<128x128xf32, #tpu.memory_space<vmem>>, vector<128x128xf32>
    %cst = arith.constant dense<0.000000e+00> : vector<8x128xf32>
    %3 = tpu.matmul %1, %2, %cst {dimension_numbers = #tpu.dot_dimension_numbers<[1], [0], [0], [1], [0, 0, 1, 1], [], []>, precision = #tpu.contract_precision<fp32>} : vector<8x128xf32>, vector<128x128xf32>, vector<8x128xf32> -> vector<8x128xf32>
    %cst_3 = arith.constant 3.125000e-02 : f32
    %4 = vector.broadcast %cst_3 : f32 to vector<8x128xf32>
    %5 = arith.mulf %3, %4 : vector<8x128xf32>
    %cst_4 = arith.constant 9.99999997E-7 : f32
    %6 = vector.broadcast %cst_4 : f32 to vector<8x128xf32>
    %7 = arith.addf %5, %6 : vector<8x128xf32>
    %8 = math.rsqrt %7 : vector<8x128xf32>
    %9 = arith.mulf %0, %8 : vector<8x128xf32>
    %c0_5 = arith.constant 0 : index
    %c0_6 = arith.constant 0 : index
    %10 = vector.load %arg2[%c0_5, %c0_6] : memref<1x128xf32, #tpu.memory_space<vmem>>, vector<1x128xf32>
    %11 = vector.broadcast %10 : vector<1x128xf32> to vector<8x128xf32>
    %12 = arith.mulf %9, %11 : vector<8x128xf32>
    %c0_7 = arith.constant 0 : index
    %c0_8 = arith.constant 0 : index
    %13 = vector.load %arg4[%c0_7, %c0_8] : memref<8x128xf32, #tpu.memory_space<vmem>>, vector<8x128xf32>
    tpu.vector_store %arg4[%c0_7, %c0_8], %12 {strides = array<i32>} : memref<8x128xf32, #tpu.memory_space<vmem>>, vector<8x128xf32>,
    return
  }
  func.func @transform_0(%arg0: i32) -> (i32, i32) {
    %c0_i32 = arith.constant 0 : i32
    %c0_i32_0 = arith.constant 0 : i32
    return %arg0, %c0_i32 : i32, i32
  }
  func.func @transform_1(%arg0: i32) -> (i32, i32) {
    %c0_i32 = arith.constant 0 : i32
    %c0_i32_0 = arith.constant 0 : i32
    %c0_i32_1 = arith.constant 0 : i32
    return %c0_i32, %c0_i32_0 : i32, i32
  }
  func.func @transform_2(%arg0: i32) -> (i32, i32) {
    %c0_i32 = arith.constant 0 : i32
    %c0_i32_0 = arith.constant 0 : i32
    %c0_i32_1 = arith.constant 0 : i32
    return %c0_i32, %c0_i32_0 : i32, i32
  }
  func.func @transform_3(%arg0: i32) -> (i32, i32) {
    %c0_i32 = arith.constant 0 : i32
    %c0_i32_0 = arith.constant 0 : i32
    return %arg0, %c0_i32 : i32, i32
  }
}

</mosaic_0001>

<llo_original>
// kernel: tpu_custom_call.1
$region0: #{tpu_custom_call.1}
  #allocation0 [shape = 'u32[]', space=smem, size = 0x4, offset = 0x4, fixed_abs, tag = 'smem constant byte address 0x4 - core index']
  #allocation1 [shape = 'u32[144,128]{1,0:T(1,128)}', space=vmem, size = 0x12000, scoped, tag = 'internal scratch']
  %s0 = inlined_call_operand.hbm [shape: f32[8,128], index: 0, kind: input, shape index: {}]
  %s1 = inlined_call_operand.hbm [shape: f32[1,128], index: 1, kind: input, shape index: {}]
  %s2 = inlined_call_operand.hbm [shape: f32[128,128], index: 2, kind: input, shape index: {}]
  %s3 = inlined_call_operand.hbm [shape: f32[8,128], index: 3, kind: output, shape index: {}]
  %s4 = sld [smem:[#allocation0]]
  $region34: #{tpu_custom_call.1} parent=0
    _
  %s6 = ssub.s32 1, %s4
  %s7 = scalar_select 0, %s6, %s4
  $region1: #{tpu_custom_call.1} parent=0
    #allocation2 [shape = 'u8[4096]{0}', space=vmem, size = 0x1000, scoped, tag = 'input window, operand 0, single buffered']
    #allocation3 [shape = 's32[1]{0}', space=sflag, size = 0x4, scoped, tag = 'scoped memory for tpu_custom_call.1']
    #allocation4 [shape = 's32[1]{0}', space=sflag, size = 0x4, scoped, tag = 'scoped memory for tpu_custom_call.1']
    #allocation5 [shape = 'u8[512]{0}', space=vmem, size = 0x400, scoped, tag = 'input window, operand 1, single buffered']
    #allocation6 [shape = 's32[1]{0}', space=sflag, size = 0x4, scoped, tag = 'scoped memory for tpu_custom_call.1']
    #allocation7 [shape = 'u8[65536]{0}', space=vmem, size = 0x10000, scoped, tag = 'input window, operand 2, single buffered']
    #allocation8 [shape = 'u8[4096]{0}', space=vmem, size = 0x1000, scoped, tag = 'output window, operand 0, single buffered']
    %8 = vsyncpa [#allocation3], 0
    %9 = vsyncpa [#allocation6], 0
    %10 = vsyncpa [#allocation4], 0
    // Predicated region
    $region2: #{tpu_custom_call.1} parent=1 // pred_check
      _
    $region3: #{tpu_custom_call.1} parent=1 // pred_check_branch
      %12 = sbr.rel (0) target = $region5
    $region4: #{tpu_custom_call.1} parent=1 // pred_region
      %s14 = ssub.s32 128, 128
      %15 = vsyncadd [#allocation3], %s14
      %s17 = sshll.u32 [#allocation2], 4
      %s18 = int_to_ptr.vmem [resolvable:$true] %s17
      %20 = dma.hbm_to_vmem [thread:$0]  %s0, 128, %s18, [#allocation3]
    $region5: #{tpu_custom_call.1} parent=1 // pred_fallthru
      _
    // Predicated region
    $region6: #{tpu_custom_call.1} parent=1 // pred_check
      _
    $region7: #{tpu_custom_call.1} parent=1 // pred_check_branch
      %22 = sbr.rel (0) target = $region9
    $region8: #{tpu_custom_call.1} parent=1 // pred_region
      %s24 = ssub.s32 16, 16
      %25 = vsyncadd [#allocation6], %s24
      %s27 = sshll.u32 [#allocation5], 4
      %s28 = int_to_ptr.vmem [resolvable:$true] %s27
      %30 = dma.hbm_to_vmem [thread:$0]  %s1, 16, %s28, [#allocation6]
    $region9: #{tpu_custom_call.1} parent=1 // pred_fallthru
      _
    // Predicated region
    $region10: #{tpu_custom_call.1} parent=1 // pred_check
      _
    $region11: #{tpu_custom_call.1} parent=1 // pred_check_branch
      %32 = sbr.rel (0) target = $region13
    $region12: #{tpu_custom_call.1} parent=1 // pred_region
      %s34 = ssub.s32 2048, 2048
      %35 = vsyncadd [#allocation6], %s34
      %s36 = sshll.u32 [#allocation7], 4
      %s37 = int_to_ptr.vmem [resolvable:$true] %s36
      %42 = dma.hbm_to_vmem [thread:$0]  %s2, 2048, %s37, [#allocation6], 128, 128, 8
    $region13: #{tpu_custom_call.1} parent=1 // pred_fallthru
      _
    // Predicated region
    $region14: #{tpu_custom_call.1} parent=1 // pred_check
      _
    $region15: #{tpu_custom_call.1} parent=1 // pred_check_branch
      %44 = sbr.rel (0) target = $region17
    $region16: #{tpu_custom_call.1} parent=1 // pred_region
      %45 = dma.done [#allocation3], 128
    $region17: #{tpu_custom_call.1} parent=1 // pred_fallthru
      _
    // Predicated region
    $region18: #{tpu_custom_call.1} parent=1 // pred_check
      _
    $region19: #{tpu_custom_call.1} parent=1 // pred_check_branch
      %47 = sbr.rel (0) target = $region21
    $region20: #{tpu_custom_call.1} parent=1 // pred_region
      %48 = dma.done [#allocation6], 16
    $region21: #{tpu_custom_call.1} parent=1 // pred_fallthru
      _
    // Predicated region
    $region22: #{tpu_custom_call.1} parent=1 // pred_check
      _
    $region23: #{tpu_custom_call.1} parent=1 // pred_check_branch
      %50 = sbr.rel (0) target = $region25
    $region24: #{tpu_custom_call.1} parent=1 // pred_region
      %51 = dma.done [#allocation6], 2048
    $region25: #{tpu_custom_call.1} parent=1 // pred_fallthru
      _
    %v52 = vld [vmem:[#allocation2] sm:$0xff]
    %v53 = vmul.f32 %v52, %v52
    %v54 = vld [vmem:[#allocation7] sm:$0xff]
    %v55 = vld [vmem:[#allocation7 + $0x8] sm:$0xff]
    %v56 = vld [vmem:[#allocation7 + $0x10] sm:$0xff]
    %v57 = vld [vmem:[#allocation7 + $0x18] sm:$0xff]
    %v58 = vld [vmem:[#allocation7 + $0x20] sm:$0xff]
    %v59 = vld [vmem:[#allocation7 + $0x28] sm:$0xff]
    %v60 = vld [vmem:[#allocation7 + $0x30] sm:$0xff]
    %v61 = vld [vmem:[#allocation7 + $0x38] sm:$0xff]
    %v62 = vld [vmem:[#allocation7 + $0x40] sm:$0xff]
    %v63 = vld [vmem:[#allocation7 + $0x48] sm:$0xff]
    %v64 = vld [vmem:[#allocation7 + $0x50] sm:$0xff]
    %v65 = vld [vmem:[#allocation7 + $0x58] sm:$0xff]
    %v66 = vld [vmem:[#allocation7 + $0x60] sm:$0xff]
    %v67 = vld [vmem:[#allocation7 + $0x68] sm:$0xff]
    %v68 = vld [vmem:[#allocation7 + $0x70] sm:$0xff]
    %v69 = vld [vmem:[#allocation7 + $0x78] sm:$0xff]
    %70 = vmatprep.subr.mxu0 0.0
    %v71 = vand.u32 %v54, 4294901760
    %72 = vmatpush1.msra.mxu0 %v71
    %73 = vmatprep.subr.mxu0 0.0
    %v74 = vand.u32 %v55, 4294901760
    %75 = vmatpush1.msra.mxu0 %v74
    %76 = vmatprep.subr.mxu0 0.0
    %v77 = vand.u32 %v56, 4294901760
    %78 = vmatpush1.msra.mxu0 %v77
    %79 = vmatprep.subr.mxu0 0.0
    %v80 = vand.u32 %v57, 4294901760
    %81 = vmatpush1.msra.mxu0 %v80
    %82 = vmatprep.subr.mxu0 0.0
    %v83 = vand.u32 %v58, 4294901760
    %84 = vmatpush1.msra.mxu0 %v83
    %85 = vmatprep.subr.mxu0 0.0
    %v86 = vand.u32 %v59, 4294901760
    %87 = vmatpush1.msra.mxu0 %v86
    %88 = vmatprep.subr.mxu0 0.0
    %v89 = vand.u32 %v60, 4294901760
    %90 = vmatpush1.msra.mxu0 %v89
    %91 = vmatprep.subr.mxu0 0.0
    %v92 = vand.u32 %v61, 4294901760
    %93 = vmatpush1.msra.mxu0 %v92
    %94 = vmatprep.subr.mxu0 0.0
    %v95 = vand.u32 %v62, 4294901760
    %96 = vmatpush1.msra.mxu0 %v95
    %97 = vmatprep.subr.mxu0 0.0
    %v98 = vand.u32 %v63, 4294901760
    %99 = vmatpush1.msra.mxu0 %v98
    %100 = vmatprep.subr.mxu0 0.0
    %v101 = vand.u32 %v64, 4294901760
    %102 = vmatpush1.msra.mxu0 %v101
    %103 = vmatprep.subr.mxu0 0.0
    %v104 = vand.u32 %v65, 4294901760
    %105 = vmatpush1.msra.mxu0 %v104
    %106 = vmatprep.subr.mxu0 0.0
    %v107 = vand.u32 %v66, 4294901760
    %108 = vmatpush1.msra.mxu0 %v107
    %109 = vmatprep.subr.mxu0 0.0
    %v110 = vand.u32 %v67, 4294901760
    %111 = vmatpush1.msra.mxu0 %v110
    %112 = vmatprep.subr.mxu0 0.0
    %v113 = vand.u32 %v68, 4294901760
    %114 = vmatpush1.msra.mxu0 %v113
    %115 = vmatprep.subr.mxu0 0.0
    %v116 = vand.u32 %v69, 4294901760
    %117 = vmatpush1.msra.mxu0 %v116
    %118 = vmatprep.subr.mxu0 0.0
    %119 = vmatpush1.msra.mxu0 0.0
    %120 = vmatprep.subr.mxu0 0.0
    %121 = vmatpush1.msra.mxu0 0.0
    %122 = vmatprep.subr.mxu0 0.0
    %123 = vmatpush1.msra.mxu0 0.0
    %124 = vmatprep.subr.mxu0 0.0
    %125 = vmatpush1.msra.mxu0 0.0
    %126 = vmatprep.subr.mxu0 0.0
    %127 = vmatpush1.msra.mxu0 0.0
    %128 = vmatprep.subr.mxu0 0.0
    %129 = vmatpush1.msra.mxu0 0.0
    %130 = vmatprep.subr.mxu0 0.0
    %131 = vmatpush1.msra.mxu0 0.0
    %132 = vmatprep.subr.mxu0 0.0
    %133 = vmatpush1.msra.mxu0 0.0
    %134 = vmatprep.subr.mxu0 0.0
    %135 = vmatpush1.msra.mxu0 0.0
    %136 = vmatprep.subr.mxu0 0.0
    %137 = vmatpush1.msra.mxu0 0.0
    %138 = vmatprep.subr.mxu0 0.0
    %139 = vmatpush1.msra.mxu0 0.0
    %140 = vmatprep.subr.mxu0 0.0
    %141 = vmatpush1.msra.mxu0 0.0
    %142 = vmatprep.subr.mxu0 0.0
    %143 = vmatpush1.msra.mxu0 0.0
    %144 = vmatprep.subr.mxu0 0.0
    %145 = vmatpush1.msra.mxu0 0.0
    %146 = vmatprep.subr.mxu0 0.0
    %147 = vmatpush1.msra.mxu0 0.0
    %148 = vmatprep.subr.mxu0 0.0
    %149 = vmatpush1.msra.mxu0 0.0
    %150 = vmatprep.mubr.f32.mxu0 0.0
    %v151 = vand.u32 %v53, 4294901760
    %v152 = vsub.f32 %v53, %v151
    %v153 = vand.u32 %v152, 4294901760
    %v154 = vsub.f32 %v152, %v153
    %v155 = vand.u32 %v154, 4294901760
    %156 = vmatmul.mubr.f32.gmra.mrb[0].mxu0 %v155
    %v157 = vpop.f32.mrb[0].mxu0
    %v158 = vadd.f32 0.0, %v157
    %v159 = vpop.f32.mrb[0].mxu0
    %160 = vdwg.mxu0
    %161 = vmatprep.subr.mxu0 0.0
    %v162 = vand.u32 %v54, 4294901760
    %v163 = vsub.f32 %v54, %v162
    %v164 = vand.u32 %v163, 4294901760
    %v165 = vsub.f32 %v163, %v164
    %v166 = vand.u32 %v165, 4294901760
    %167 = vmatpush1.msra.mxu0 %v166
    %168 = vmatprep.subr.mxu0 0.0
    %v169 = vand.u32 %v55, 4294901760
    %v170 = vsub.f32 %v55, %v169
    %v171 = vand.u32 %v170, 4294901760
    %v172 = vsub.f32 %v170, %v171
    %v173 = vand.u32 %v172, 4294901760
    %174 = vmatpush1.msra.mxu0 %v173
    %175 = vmatprep.subr.mxu0 0.0
    %v176 = vand.u32 %v56, 4294901760
    %v177 = vsub.f32 %v56, %v176
    %v178 = vand.u32 %v177, 4294901760
    %v179 = vsub.f32 %v177, %v178
    %v180 = vand.u32 %v179, 4294901760
    %181 = vmatpush1.msra.mxu0 %v180
    %182 = vmatprep.subr.mxu0 0.0
    %v183 = vand.u32 %v57, 4294901760
    %v184 = vsub.f32 %v57, %v183
    %v185 = vand.u32 %v184, 4294901760
    %v186 = vsub.f32 %v184, %v185
    %v187 = vand.u32 %v186, 4294901760
    %188 = vmatpush1.msra.mxu0 %v187
    %189 = vmatprep.subr.mxu0 0.0
    %v190 = vand.u32 %v58, 4294901760
    %v191 = vsub.f32 %v58, %v190
    %v192 = vand.u32 %v191, 4294901760
    %v193 = vsub.f32 %v191, %v192
    %v194 = vand.u32 %v193, 4294901760
    %195 = vmatpush1.msra.mxu0 %v194
    %196 = vmatprep.subr.mxu0 0.0
    %v197 = vand.u32 %v59, 4294901760
    %v198 = vsub.f32 %v59, %v197
    %v199 = vand.u32 %v198, 4294901760
    %v200 = vsub.f32 %v198, %v199
    %v201 = vand.u32 %v200, 4294901760
    %202 = vmatpush1.msra.mxu0 %v201
    %203 = vmatprep.subr.mxu0 0.0
    %v204 = vand.u32 %v60, 4294901760
    %v205 = vsub.f32 %v60, %v204
    %v206 = vand.u32 %v205, 4294901760
    %v207 = vsub.f32 %v205, %v206
    %v208 = vand.u32 %v207, 4294901760
    %209 = vmatpush1.msra.mxu0 %v208
    %210 = vmatprep.subr.mxu0 0.0
    %v211 = vand.u32 %v61, 4294901760
    %v212 = vsub.f32 %v61, %v211
    %v213 = vand.u32 %v212, 4294901760
    %v214 = vsub.f32 %v212, %v213
    %v215 = vand.u32 %v214, 4294901760
    %216 = vmatpush1.msra.mxu0 %v215
    %217 = vmatprep.subr.mxu0 0.0
    %v218 = vand.u32 %v62, 4294901760
    %v219 = vsub.f32 %v62, %v218
    %v220 = vand.u32 %v219, 4294901760
    %v221 = vsub.f32 %v219, %v220
    %v222 = vand.u32 %v221, 4294901760
    %223 = vmatpush1.msra.mxu0 %v222
    %224 = vmatprep.subr.mxu0 0.0
    %v225 = vand.u32 %v63, 4294901760
    %v226 = vsub.f32 %v63, %v225
    %v227 = vand.u32 %v226, 4294901760
    %v228 = vsub.f32 %v226, %v227
    %v229 = vand.u32 %v228, 4294901760
    %230 = vmatpush1.msra.mxu0 %v229
    %231 = vmatprep.subr.mxu0 0.0
    %v232 = vand.u32 %v64, 4294901760
    %v233 = vsub.f32 %v64, %v232
    %v234 = vand.u32 %v233, 4294901760
    %v235 = vsub.f32 %v233, %v234
    %v236 = vand.u32 %v235, 4294901760
    %237 = vmatpush1.msra.mxu0 %v236
    %238 = vmatprep.subr.mxu0 0.0
    %v239 = vand.u32 %v65, 4294901760
    %v240 = vsub.f32 %v65, %v239
    %v241 = vand.u32 %v240, 4294901760
    %v242 = vsub.f32 %v240, %v241
    %v243 = vand.u32 %v242, 4294901760
    %244 = vmatpush1.msra.mxu0 %v243
    %245 = vmatprep.subr.mxu0 0.0
    %v246 = vand.u32 %v66, 4294901760
    %v247 = vsub.f32 %v66, %v246
    %v248 = vand.u32 %v247, 4294901760
    %v249 = vsub.f32 %v247, %v248
    %v250 = vand.u32 %v249, 4294901760
    %251 = vmatpush1.msra.mxu0 %v250
    %252 = vmatprep.subr.mxu0 0.0
    %v253 = vand.u32 %v67, 4294901760
    %v254 = vsub.f32 %v67, %v253
    %v255 = vand.u32 %v254, 4294901760
    %v256 = vsub.f32 %v254, %v255
    %v257 = vand.u32 %v256, 4294901760
    %258 = vmatpush1.msra.mxu0 %v257
    %259 = vmatprep.subr.mxu0 0.0
    %v260 = vand.u32 %v68, 4294901760
    %v261 = vsub.f32 %v68, %v260
    %v262 = vand.u32 %v261, 4294901760
    %v263 = vsub.f32 %v261, %v262
    %v264 = vand.u32 %v263, 4294901760
    %265 = vmatpush1.msra.mxu0 %v264
    %266 = vmatprep.subr.mxu0 0.0
    %v267 = vand.u32 %v69, 4294901760
    %v268 = vsub.f32 %v69, %v267
    %v269 = vand.u32 %v268, 4294901760
    %v270 = vsub.f32 %v268, %v269
    %v271 = vand.u32 %v270, 4294901760
    %272 = vmatpush1.msra.mxu0 %v271
    %273 = vmatprep.subr.mxu0 0.0
    %274 = vmatpush1.msra.mxu0 0.0
    %275 = vmatprep.subr.mxu0 0.0
    %276 = vmatpush1.msra.mxu0 0.0
    %277 = vmatprep.subr.mxu0 0.0
    %278 = vmatpush1.msra.mxu0 0.0
    %279 = vmatprep.subr.mxu0 0.0
    %280 = vmatpush1.msra.mxu0 0.0
    %281 = vmatprep.subr.mxu0 0.0
    %282 = vmatpush1.msra.mxu0 0.0
    %283 = vmatprep.subr.mxu0 0.0
    %284 = vmatpush1.msra.mxu0 0.0
    %285 = vmatprep.subr.mxu0 0.0
    %286 = vmatpush1.msra.mxu0 0.0
    %287 = vmatprep.subr.mxu0 0.0
    %288 = vmatpush1.msra.mxu0 0.0
    %289 = vmatprep.subr.mxu0 0.0
    %290 = vmatpush1.msra.mxu0 0.0
    %291 = vmatprep.subr.mxu0 0.0
    %292 = vmatpush1.msra.mxu0 0.0
    %293 = vmatprep.subr.mxu0 0.0
    %294 = vmatpush1.msra.mxu0 0.0
    %295 = vmatprep.subr.mxu0 0.0
    %296 = vmatpush1.msra.mxu0 0.0
    %297 = vmatprep.subr.mxu0 0.0
    %298 = vmatpush1.msra.mxu0 0.0
    %299 = vmatprep.subr.mxu0 0.0
    %300 = vmatpush1.msra.mxu0 0.0
    %301 = vmatprep.subr.mxu0 0.0
    %302 = vmatpush1.msra.mxu0 0.0
    %303 = vmatprep.subr.mxu0 0.0
    %304 = vmatpush1.msra.mxu0 0.0
    %305 = vmatprep.mubr.f32.mxu0 0.0
    %v306 = vand.u32 %v53, 4294901760
    %307 = vmatmul.mubr.f32.gmra.mrb[0].mxu0 %v306
    %v308 = vpop.f32.mrb[0].mxu0
    %v309 = vadd.f32 %v158, %v308
    %v310 = vpop.f32.mrb[0].mxu0
    %311 = vdwg.mxu0
    %312 = vmatprep.subr.mxu0 0.0
    %v313 = vand.u32 %v54, 4294901760
    %v314 = vsub.f32 %v54, %v313
    %315 = vmatpush1.msra.mxu0 %v314
    %316 = vmatprep.subr.mxu0 0.0
    %v317 = vand.u32 %v55, 4294901760
    %v318 = vsub.f32 %v55, %v317
    %319 = vmatpush1.msra.mxu0 %v318
    %320 = vmatprep.subr.mxu0 0.0
    %v321 = vand.u32 %v56, 4294901760
    %v322 = vsub.f32 %v56, %v321
    %323 = vmatpush1.msra.mxu0 %v322
    %324 = vmatprep.subr.mxu0 0.0
    %v325 = vand.u32 %v57, 4294901760
    %v326 = vsub.f32 %v57, %v325
    %327 = vmatpush1.msra.mxu0 %v326
    %328 = vmatprep.subr.mxu0 0.0
    %v329 = vand.u32 %v58, 4294901760
    %v330 = vsub.f32 %v58, %v329
    %331 = vmatpush1.msra.mxu0 %v330
    %332 = vmatprep.subr.mxu0 0.0
    %v333 = vand.u32 %v59, 4294901760
    %v334 = vsub.f32 %v59, %v333
    %335 = vmatpush1.msra.mxu0 %v334
    %336 = vmatprep.subr.mxu0 0.0
    %v337 = vand.u32 %v60, 4294901760
    %v338 = vsub.f32 %v60, %v337
    %339 = vmatpush1.msra.mxu0 %v338
    %340 = vmatprep.subr.mxu0 0.0
    %v341 = vand.u32 %v61, 4294901760
    %v342 = vsub.f32 %v61, %v341
    %343 = vmatpush1.msra.mxu0 %v342
    %344 = vmatprep.subr.mxu0 0.0
    %v345 = vand.u32 %v62, 4294901760
    %v346 = vsub.f32 %v62, %v345
    %347 = vmatpush1.msra.mxu0 %v346
    %348 = vmatprep.subr.mxu0 0.0
    %v349 = vand.u32 %v63, 4294901760
    %v350 = vsub.f32 %v63, %v349
    %351 = vmatpush1.msra.mxu0 %v350
    %352 = vmatprep.subr.mxu0 0.0
    %v353 = vand.u32 %v64, 4294901760
    %v354 = vsub.f32 %v64, %v353
    %355 = vmatpush1.msra.mxu0 %v354
    %356 = vmatprep.subr.mxu0 0.0
    %v357 = vand.u32 %v65, 4294901760
    %v358 = vsub.f32 %v65, %v357
    %359 = vmatpush1.msra.mxu0 %v358
    %360 = vmatprep.subr.mxu0 0.0
    %v361 = vand.u32 %v66, 4294901760
    %v362 = vsub.f32 %v66, %v361
    %363 = vmatpush1.msra.mxu0 %v362
    %364 = vmatprep.subr.mxu0 0.0
    %v365 = vand.u32 %v67, 4294901760
    %v366 = vsub.f32 %v67, %v365
    %367 = vmatpush1.msra.mxu0 %v366
    %368 = vmatprep.subr.mxu0 0.0
    %v369 = vand.u32 %v68, 4294901760
    %v370 = vsub.f32 %v68, %v369
    %371 = vmatpush1.msra.mxu0 %v370
    %372 = vmatprep.subr.mxu0 0.0
    %v373 = vand.u32 %v69, 4294901760
    %v374 = vsub.f32 %v69, %v373
    %375 = vmatpush1.msra.mxu0 %v374
    %376 = vmatprep.subr.mxu0 0.0
    %377 = vmatpush1.msra.mxu0 0.0
    %378 = vmatprep.subr.mxu0 0.0
    %379 = vmatpush1.msra.mxu0 0.0
    %380 = vmatprep.subr.mxu0 0.0
    %381 = vmatpush1.msra.mxu0 0.0
    %382 = vmatprep.subr.mxu0 0.0
    %383 = vmatpush1.msra.mxu0 0.0
    %384 = vmatprep.subr.mxu0 0.0
    %385 = vmatpush1.msra.mxu0 0.0
    %386 = vmatprep.subr.mxu0 0.0
    %387 = vmatpush1.msra.mxu0 0.0
    %388 = vmatprep.subr.mxu0 0.0
    %389 = vmatpush1.msra.mxu0 0.0
    %390 = vmatprep.subr.mxu0 0.0
    %391 = vmatpush1.msra.mxu0 0.0
    %392 = vmatprep.subr.mxu0 0.0
    %393 = vmatpush1.msra.mxu0 0.0
    %394 = vmatprep.subr.mxu0 0.0
    %395 = vmatpush1.msra.mxu0 0.0
    %396 = vmatprep.subr.mxu0 0.0
    %397 = vmatpush1.msra.mxu0 0.0
    %398 = vmatprep.subr.mxu0 0.0
    %399 = vmatpush1.msra.mxu0 0.0
    %400 = vmatprep.subr.mxu0 0.0
    %401 = vmatpush1.msra.mxu0 0.0
    %402 = vmatprep.subr.mxu0 0.0
    %403 = vmatpush1.msra.mxu0 0.0
    %404 = vmatprep.subr.mxu0 0.0
    %405 = vmatpush1.msra.mxu0 0.0
    %406 = vmatprep.subr.mxu0 0.0
    %407 = vmatpush1.msra.mxu0 0.0
    %408 = vmatprep.mubr.f32.mxu0 0.0
    %v409 = vand.u32 %v53, 4294901760
    %v410 = vsub.f32 %v53, %v409
    %411 = vmatmul.mubr.f32.gmra.mrb[0].mxu0 %v410
    %v412 = vpop.f32.mrb[0].mxu0
    %v413 = vadd.f32 %v309, %v412
    %v414 = vpop.f32.mrb[0].mxu0
    %415 = vdwg.mxu0
    %416 = vmatprep.subr.mxu0 0.0
    %v417 = vand.u32 %v54, 4294901760
    %418 = vmatpush1.msra.mxu0 %v417
    %419 = vmatprep.subr.mxu0 0.0
    %v420 = vand.u32 %v55, 4294901760
    %421 = vmatpush1.msra.mxu0 %v420
    %422 = vmatprep.subr.mxu0 0.0
    %v423 = vand.u32 %v56, 4294901760
    %424 = vmatpush1.msra.mxu0 %v423
    %425 = vmatprep.subr.mxu0 0.0
    %v426 = vand.u32 %v57, 4294901760
    %427 = vmatpush1.msra.mxu0 %v426
    %428 = vmatprep.subr.mxu0 0.0
    %v429 = vand.u32 %v58, 4294901760
    %430 = vmatpush1.msra.mxu0 %v429
    %431 = vmatprep.subr.mxu0 0.0
    %v432 = vand.u32 %v59, 4294901760
    %433 = vmatpush1.msra.mxu0 %v432
    %434 = vmatprep.subr.mxu0 0.0
    %v435 = vand.u32 %v60, 4294901760
    %436 = vmatpush1.msra.mxu0 %v435
    %437 = vmatprep.subr.mxu0 0.0
    %v438 = vand.u32 %v61, 4294901760
    %439 = vmatpush1.msra.mxu0 %v438
    %440 = vmatprep.subr.mxu0 0.0
    %v441 = vand.u32 %v62, 4294901760
    %442 = vmatpush1.msra.mxu0 %v441
    %443 = vmatprep.subr.mxu0 0.0
    %v444 = vand.u32 %v63, 4294901760
    %445 = vmatpush1.msra.mxu0 %v444
    %446 = vmatprep.subr.mxu0 0.0
    %v447 = vand.u32 %v64, 4294901760
    %448 = vmatpush1.msra.mxu0 %v447
    %449 = vmatprep.subr.mxu0 0.0
    %v450 = vand.u32 %v65, 4294901760
    %451 = vmatpush1.msra.mxu0 %v450
    %452 = vmatprep.subr.mxu0 0.0
    %v453 = vand.u32 %v66, 4294901760
    %454 = vmatpush1.msra.mxu0 %v453
    %455 = vmatprep.subr.mxu0 0.0
    %v456 = vand.u32 %v67, 4294901760
    %457 = vmatpush1.msra.mxu0 %v456
    %458 = vmatprep.subr.mxu0 0.0
    %v459 = vand.u32 %v68, 4294901760
    %460 = vmatpush1.msra.mxu0 %v459
    %461 = vmatprep.subr.mxu0 0.0
    %v462 = vand.u32 %v69, 4294901760
    %463 = vmatpush1.msra.mxu0 %v462
    %464 = vmatprep.subr.mxu0 0.0
    %465 = vmatpush1.msra.mxu0 0.0
    %466 = vmatprep.subr.mxu0 0.0
    %467 = vmatpush1.msra.mxu0 0.0
    %468 = vmatprep.subr.mxu0 0.0
    %469 = vmatpush1.msra.mxu0 0.0
    %470 = vmatprep.subr.mxu0 0.0
    %471 = vmatpush1.msra.mxu0 0.0
    %472 = vmatprep.subr.mxu0 0.0
    %473 = vmatpush1.msra.mxu0 0.0
    %474 = vmatprep.subr.mxu0 0.0
    %475 = vmatpush1.msra.mxu0 0.0
    %476 = vmatprep.subr.mxu0 0.0
    %477 = vmatpush1.msra.mxu0 0.0
    %478 = vmatprep.subr.mxu0 0.0
    %479 = vmatpush1.msra.mxu0 0.0
    %480 = vmatprep.subr.mxu0 0.0
    %481 = vmatpush1.msra.mxu0 0.0
    %482 = vmatprep.subr.mxu0 0.0
    %483 = vmatpush1.msra.mxu0 0.0
    %484 = vmatprep.subr.mxu0 0.0
    %485 = vmatpush1.msra.mxu0 0.0
    %486 = vmatprep.subr.mxu0 0.0
    %487 = vmatpush1.msra.mxu0 0.0
    %488 = vmatprep.subr.mxu0 0.0
    %489 = vmatpush1.msra.mxu0 0.0
    %490 = vmatprep.subr.mxu0 0.0
    %491 = vmatpush1.msra.mxu0 0.0
    %492 = vmatprep.subr.mxu0 0.0
    %493 = vmatpush1.msra.mxu0 0.0
    %494 = vmatprep.subr.mxu0 0.0
    %495 = vmatpush1.msra.mxu0 0.0
    %496 = vmatprep.mubr.f32.mxu0 0.0
    %v497 = vand.u32 %v53, 4294901760
    %v498 = vsub.f32 %v53, %v497
    %v499 = vand.u32 %v498, 4294901760
    %500 = vmatmul.mubr.f32.gmra.mrb[0].mxu0 %v499
    %v501 = vpop.f32.mrb[0].mxu0
    %v502 = vadd.f32 %v413, %v501
    %v503 = vpop.f32.mrb[0].mxu0
    %504 = vdwg.mxu0
    %505 = vmatprep.subr.mxu0 0.0
    %v506 = vand.u32 %v54, 4294901760
    %v507 = vsub.f32 %v54, %v506
    %v508 = vand.u32 %v507, 4294901760
    %509 = vmatpush1.msra.mxu0 %v508
    %510 = vmatprep.subr.mxu0 0.0
    %v511 = vand.u32 %v55, 4294901760
    %v512 = vsub.f32 %v55, %v511
    %v513 = vand.u32 %v512, 4294901760
    %514 = vmatpush1.msra.mxu0 %v513
    %515 = vmatprep.subr.mxu0 0.0
    %v516 = vand.u32 %v56, 4294901760
    %v517 = vsub.f32 %v56, %v516
    %v518 = vand.u32 %v517, 4294901760
    %519 = vmatpush1.msra.mxu0 %v518
    %520 = vmatprep.subr.mxu0 0.0
    %v521 = vand.u32 %v57, 4294901760
    %v522 = vsub.f32 %v57, %v521
    %v523 = vand.u32 %v522, 4294901760
    %524 = vmatpush1.msra.mxu0 %v523
    %525 = vmatprep.subr.mxu0 0.0
    %v526 = vand.u32 %v58, 4294901760
    %v527 = vsub.f32 %v58, %v526
    %v528 = vand.u32 %v527, 4294901760
    %529 = vmatpush1.msra.mxu0 %v528
    %530 = vmatprep.subr.mxu0 0.0
    %v531 = vand.u32 %v59, 4294901760
    %v532 = vsub.f32 %v59, %v531
    %v533 = vand.u32 %v532, 4294901760
    %534 = vmatpush1.msra.mxu0 %v533
    %535 = vmatprep.subr.mxu0 0.0
    %v536 = vand.u32 %v60, 4294901760
    %v537 = vsub.f32 %v60, %v536
    %v538 = vand.u32 %v537, 4294901760
    %539 = vmatpush1.msra.mxu0 %v538
    %540 = vmatprep.subr.mxu0 0.0
    %v541 = vand.u32 %v61, 4294901760
    %v542 = vsub.f32 %v61, %v541
    %v543 = vand.u32 %v542, 4294901760
    %544 = vmatpush1.msra.mxu0 %v543
    %545 = vmatprep.subr.mxu0 0.0
    %v546 = vand.u32 %v62, 4294901760
    %v547 = vsub.f32 %v62, %v546
    %v548 = vand.u32 %v547, 4294901760
    %549 = vmatpush1.msra.mxu0 %v548
    %550 = vmatprep.subr.mxu0 0.0
    %v551 = vand.u32 %v63, 4294901760
    %v552 = vsub.f32 %v63, %v551
    %v553 = vand.u32 %v552, 4294901760
    %554 = vmatpush1.msra.mxu0 %v553
    %555 = vmatprep.subr.mxu0 0.0
    %v556 = vand.u32 %v64, 4294901760
    %v557 = vsub.f32 %v64, %v556
    %v558 = vand.u32 %v557, 4294901760
    %559 = vmatpush1.msra.mxu0 %v558
    %560 = vmatprep.subr.mxu0 0.0
    %v561 = vand.u32 %v65, 4294901760
    %v562 = vsub.f32 %v65, %v561
    %v563 = vand.u32 %v562, 4294901760
    %564 = vmatpush1.msra.mxu0 %v563
    %565 = vmatprep.subr.mxu0 0.0
    %v566 = vand.u32 %v66, 4294901760
    %v567 = vsub.f32 %v66, %v566
    %v568 = vand.u32 %v567, 4294901760
    %569 = vmatpush1.msra.mxu0 %v568
    %570 = vmatprep.subr.mxu0 0.0
    %v571 = vand.u32 %v67, 4294901760
    %v572 = vsub.f32 %v67, %v571
    %v573 = vand.u32 %v572, 4294901760
    %574 = vmatpush1.msra.mxu0 %v573
    %575 = vmatprep.subr.mxu0 0.0
    %v576 = vand.u32 %v68, 4294901760
    %v577 = vsub.f32 %v68, %v576
    %v578 = vand.u32 %v577, 4294901760
    %579 = vmatpush1.msra.mxu0 %v578
    %580 = vmatprep.subr.mxu0 0.0
    %v581 = vand.u32 %v69, 4294901760
    %v582 = vsub.f32 %v69, %v581
    %v583 = vand.u32 %v582, 4294901760
    %584 = vmatpush1.msra.mxu0 %v583
    %585 = vmatprep.subr.mxu0 0.0
    %586 = vmatpush1.msra.mxu0 0.0
    %587 = vmatprep.subr.mxu0 0.0
    %588 = vmatpush1.msra.mxu0 0.0
    %589 = vmatprep.subr.mxu0 0.0
    %590 = vmatpush1.msra.mxu0 0.0
    %591 = vmatprep.subr.mxu0 0.0
    %592 = vmatpush1.msra.mxu0 0.0
    %593 = vmatprep.subr.mxu0 0.0
    %594 = vmatpush1.msra.mxu0 0.0
    %595 = vmatprep.subr.mxu0 0.0
    %596 = vmatpush1.msra.mxu0 0.0
    %597 = vmatprep.subr.mxu0 0.0
    %598 = vmatpush1.msra.mxu0 0.0
    %599 = vmatprep.subr.mxu0 0.0
    %600 = vmatpush1.msra.mxu0 0.0
    %601 = vmatprep.subr.mxu0 0.0
    %602 = vmatpush1.msra.mxu0 0.0
    %603 = vmatprep.subr.mxu0 0.0
    %604 = vmatpush1.msra.mxu0 0.0
    %605 = vmatprep.subr.mxu0 0.0
    %606 = vmatpush1.msra.mxu0 0.0
    %607 = vmatprep.subr.mxu0 0.0
    %608 = vmatpush1.msra.mxu0 0.0
    %609 = vmatprep.subr.mxu0 0.0
    %610 = vmatpush1.msra.mxu0 0.0
    %611 = vmatprep.subr.mxu0 0.0
    %612 = vmatpush1.msra.mxu0 0.0
    %613 = vmatprep.subr.mxu0 0.0
    %614 = vmatpush1.msra.mxu0 0.0
    %615 = vmatprep.subr.mxu0 0.0
    %616 = vmatpush1.msra.mxu0 0.0
    %617 = vmatprep.mubr.f32.mxu0 0.0
    %v618 = vand.u32 %v53, 4294901760
    %619 = vmatmul.mubr.f32.gmra.mrb[0].mxu0 %v618
    %v620 = vpop.f32.mrb[0].mxu0
    %v621 = vadd.f32 %v502, %v620
    %v622 = vpop.f32.mrb[0].mxu0
    %623 = vdwg.mxu0
    %624 = vmatprep.subr.mxu0 0.0
    %v625 = vand.u32 %v54, 4294901760
    %626 = vmatpush1.msra.mxu0 %v625
    %627 = vmatprep.subr.mxu0 0.0
    %v628 = vand.u32 %v55, 4294901760
    %629 = vmatpush1.msra.mxu0 %v628
    %630 = vmatprep.subr.mxu0 0.0
    %v631 = vand.u32 %v56, 4294901760
    %632 = vmatpush1.msra.mxu0 %v631
    %633 = vmatprep.subr.mxu0 0.0
    %v634 = vand.u32 %v57, 4294901760
    %635 = vmatpush1.msra.mxu0 %v634
    %636 = vmatprep.subr.mxu0 0.0
    %v637 = vand.u32 %v58, 4294901760
    %638 = vmatpush1.msra.mxu0 %v637
    %639 = vmatprep.subr.mxu0 0.0
    %v640 = vand.u32 %v59, 4294901760
    %641 = vmatpush1.msra.mxu0 %v640
    %642 = vmatprep.subr.mxu0 0.0
    %v643 = vand.u32 %v60, 4294901760
    %644 = vmatpush1.msra.mxu0 %v643
    %645 = vmatprep.subr.mxu0 0.0
    %v646 = vand.u32 %v61, 4294901760
    %647 = vmatpush1.msra.mxu0 %v646
    %648 = vmatprep.subr.mxu0 0.0
    %v649 = vand.u32 %v62, 4294901760
    %650 = vmatpush1.msra.mxu0 %v649
    %651 = vmatprep.subr.mxu0 0.0
    %v652 = vand.u32 %v63, 4294901760
    %653 = vmatpush1.msra.mxu0 %v652
    %654 = vmatprep.subr.mxu0 0.0
    %v655 = vand.u32 %v64, 4294901760
    %656 = vmatpush1.msra.mxu0 %v655
    %657 = vmatprep.subr.mxu0 0.0
    %v658 = vand.u32 %v65, 4294901760
    %659 = vmatpush1.msra.mxu0 %v658
    %660 = vmatprep.subr.mxu0 0.0
    %v661 = vand.u32 %v66, 4294901760
    %662 = vmatpush1.msra.mxu0 %v661
    %663 = vmatprep.subr.mxu0 0.0
    %v664 = vand.u32 %v67, 4294901760
    %665 = vmatpush1.msra.mxu0 %v664
    %666 = vmatprep.subr.mxu0 0.0
    %v667 = vand.u32 %v68, 4294901760
    %668 = vmatpush1.msra.mxu0 %v667
    %669 = vmatprep.subr.mxu0 0.0
    %v670 = vand.u32 %v69, 4294901760
    %671 = vmatpush1.msra.mxu0 %v670
    %672 = vmatprep.subr.mxu0 0.0
    %673 = vmatpush1.msra.mxu0 0.0
    %674 = vmatprep.subr.mxu0 0.0
    %675 = vmatpush1.msra.mxu0 0.0
    %676 = vmatprep.subr.mxu0 0.0
    %677 = vmatpush1.msra.mxu0 0.0
    %678 = vmatprep.subr.mxu0 0.0
    %679 = vmatpush1.msra.mxu0 0.0
    %680 = vmatprep.subr.mxu0 0.0
    %681 = vmatpush1.msra.mxu0 0.0
    %682 = vmatprep.subr.mxu0 0.0
    %683 = vmatpush1.msra.mxu0 0.0
    %684 = vmatprep.subr.mxu0 0.0
    %685 = vmatpush1.msra.mxu0 0.0
    %686 = vmatprep.subr.mxu0 0.0
    %687 = vmatpush1.msra.mxu0 0.0
    %688 = vmatprep.subr.mxu0 0.0
    %689 = vmatpush1.msra.mxu0 0.0
    %690 = vmatprep.subr.mxu0 0.0
    %691 = vmatpush1.msra.mxu0 0.0
    %692 = vmatprep.subr.mxu0 0.0
    %693 = vmatpush1.msra.mxu0 0.0
    %694 = vmatprep.subr.mxu0 0.0
    %695 = vmatpush1.msra.mxu0 0.0
    %696 = vmatprep.subr.mxu0 0.0
    %697 = vmatpush1.msra.mxu0 0.0
    %698 = vmatprep.subr.mxu0 0.0
    %699 = vmatpush1.msra.mxu0 0.0
    %700 = vmatprep.subr.mxu0 0.0
    %701 = vmatpush1.msra.mxu0 0.0
    %702 = vmatprep.subr.mxu0 0.0
    %703 = vmatpush1.msra.mxu0 0.0
    %704 = vmatprep.mubr.f32.mxu0 0.0
    %v705 = vand.u32 %v53, 4294901760
    %706 = vmatmul.mubr.f32.gmra.mrb[0].mxu0 %v705
    %v707 = vpop.f32.mrb[0].mxu0
    %v708 = vadd.f32 %v621, %v707
    %v709 = vpop.f32.mrb[0].mxu0
    %710 = vdwg.mxu0
    %v711 = vmul.f32 %v708, 0.03125
    %v712 = vadd.f32 %v711, 1e-06
    %v713 = vrsqrt.pop %v712
    %v714 = vmul.f32 %v52, %v713
    %v715 = vld [vmem:[#allocation5] sm:$0x1]
    %v717 = vlaneseq
    %v718 = vshrl.u32 %v717, 7
    %v719 = vsub.s32 0, %v718
    %v720 = vrot.slane %v715, %v719
    %v722 = vmul.f32 %v714, %v720
    %723 = vst [vmem:[#allocation8] sm:$0xff] %v722
    // Predicated region
    $region26: #{tpu_custom_call.1} parent=1 // pred_check
      _
    $region27: #{tpu_custom_call.1} parent=1 // pred_check_branch
      %725 = sbr.rel (0) target = $region29
    $region28: #{tpu_custom_call.1} parent=1 // pred_region
      %s727 = ssub.s32 128, 128
      %728 = vsyncadd [#allocation4], %s727
      %s730 = sshll.u32 [#allocation8], 4
      %s731 = int_to_ptr.vmem [resolvable:$true] %s730
      %733 = dma.vmem_to_hbm [thread:$0]  %s731, 128, %s3, [#allocation4]
    $region29: #{tpu_custom_call.1} parent=1 // pred_fallthru
      _
    // Predicated region
    $region30: #{tpu_custom_call.1} parent=1 // pred_check
      _
    $region31: #{tpu_custom_call.1} parent=1 // pred_check_branch
      %735 = sbr.rel (0) target = $region33
    $region32: #{tpu_custom_call.1} parent=1 // pred_region
      %736 = dma.done [#allocation4], 128
    $region33: #{tpu_custom_call.1} parent=1 // pred_fallthru
      _
    %737 = vsyncpa [#allocation3], 1
    %738 = vsyncpa [#allocation6], 1
    %739 = vsyncpa [#allocation4], 1

</llo_original>
